<compile_context>
chip_gen: v7x
topology: tpu7x:2x2x1
jax: 0.10.0
libtpu: 0.0.40
codegen_flags: <defaults>
</compile_context>

<pallas_src>
import math

import jax
import jax.numpy as jnp
from jax.experimental import pallas as pl
from jax.experimental.pallas import tpu as pltpu


def _round_up(x: int, m: int) -> int:
    return ((x + m - 1) // m) * m


def _select_n_tile(n: int, tn_max: int):
    """Lane-dense N tile (multiple of 128) and padded N.

    Prefers >=2 N blocks (v7x megacore: second TensorCore gets work on the
    'parallel' axis) whenever that does not force extra padding.
    """
    nu = _round_up(n, 128) // 128            # 128-lane groups needed
    tn_lanes = min(max(tn_max // 128, 1), nu)
    half = -(-nu // 2)
    if nu >= 2 and nu % half == 0:
        tn_lanes = min(tn_lanes, half)
    while nu % tn_lanes != 0:                # tile must divide padded N
        tn_lanes -= 1
    return tn_lanes * 128, nu * 128


def _select_k_tile(k: int, tk_max: int):
    """Largest 128-multiple K tile <= tk_max that divides padded K."""
    kp = _round_up(k, 128)
    tk = min(max((tk_max // 128) * 128, 128), kp)
    while kp % tk != 0:
        tk -= 128
    return tk, kp


def _pack_params(weight, bias, kp: int, np_: int, operand_dtype):
    """One-time pad + transpose of the PyTorch-layout (N, K) weight.

    Done at module init so the per-call forward never re-pads constant
    parameters and the kernel consumes a standard (Kp, Np) RHS (no per-step
    transpose competing with MXU pushes for the vector-extended slots).
    """
    n, k = weight.shape
    w = weight
    if (n, k) != (np_, kp):
        w = jnp.pad(w, ((0, np_ - n), (0, kp - k)))
    w_t = jnp.asarray(w.T, dtype=operand_dtype)            # (Kp, Np)
    b = bias
    if n != np_:
        b = jnp.pad(b, (0, np_ - n))
    b = b.reshape(1, np_).astype(jnp.float32)               # bias add stays f32
    return w_t, b


def _linear_kernel(x_ref, w_ref, b_ref, o_ref):
    # x_ref: (tm, tk)  activations (f32 or bf16)
    # w_ref: (tk, tn)  pre-transposed weight tile (standard RHS layout)
    # b_ref: (1,  tn)  f32 bias tile
    # o_ref: (tm, tn)  f32 output tile; its BlockSpec index ignores the K grid
    #                  axis, so it stays resident in VMEM across K and doubles
    #                  as the accumulator (no scratch, no final copy pass).
    @pl.when(pl.program_id(2) == 0)
    def _():
        o_ref[...] = jnp.broadcast_to(b_ref[...], o_ref.shape)

    o_ref[...] += jnp.dot(x_ref[...], w_ref[...],
                          preferred_element_type=jnp.float32)


def pallas_linear(x2d, w_packed, b_packed, *, n_out, tn, tk,
                  tm_max=512, use_bf16=False):
    """y = x @ W^T + b, with W supplied pre-transposed/padded as (Kp, Np)."""
    m, k = x2d.shape
    kp, np_ = w_packed.shape
    assert kp >= k and kp % tk == 0 and np_ % tn == 0

    # M tile: full extent when small (block == full dim satisfies the (8,128)
    # rule and avoids padding the activation), else 512-row tiles.
    if m <= tm_max:
        tm, mp = m, m
    else:
        tm = tm_max
        mp = _round_up(m, tm)

    xp = x2d.astype(jnp.bfloat16) if use_bf16 else x2d
    if (mp, kp) != (m, k):
        # Only the activation can need a per-call pad (ragged M/K); zero
        # rows/cols contribute nothing to the contraction.
        xp = jnp.pad(xp, ((0, mp - m), (0, kp - k)))

    grid = (mp // tm, np_ // tn, kp // tk)

    out = pl.pallas_call(
        _linear_kernel,
        out_shape=jax.ShapeDtypeStruct((mp, np_), jnp.float32),
        grid_spec=pltpu.PrefetchScalarGridSpec(
            num_scalar_prefetch=0,
            grid=grid,
            in_specs=[
                pl.BlockSpec((tm, tk), lambda i, j, kk: (i, kk)),
                pl.BlockSpec((tk, tn), lambda i, j, kk: (kk, j)),
                pl.BlockSpec((1, tn), lambda i, j, kk: (0, j)),
            ],
            out_specs=pl.BlockSpec((tm, tn), lambda i, j, kk: (i, j)),
        ),
        compiler_params=pltpu.CompilerParams(
            dimension_semantics=("parallel", "parallel", "arbitrary"),
            # Raised above the 16/32 MiB scoped defaults so the larger tiles
            # keep full double-buffering; <= 48 MiB leaves headroom on v7x's
            # 64 MiB VMEM and is far below v5e/v6e's 128 MiB.
            vmem_limit_bytes=48 * 1024 * 1024,
        ),
    )(xp, w_packed, b_packed)

    return out[:m, :n_out]


class LinearLayerPallas:
    """Pallas port of the PyTorch LinearLayer (F.linear(x, W, b))."""

    def __init__(self, key, in_features, out_features, *,
                 tm_max=512, tn_max=512, tk_max=2048, use_bf16=False):
        kw, kb = jax.random.split(key)
        # kaiming_uniform_(a=sqrt(5)) on an (out, in) matrix and the bias init
        # both reduce to U(-1/sqrt(fan_in), 1/sqrt(fan_in)), fan_in=in_features.
        bound = 1.0 / math.sqrt(in_features)
        self.weight = jax.random.uniform(
            kw, (out_features, in_features), jnp.float32, -bound, bound)
        self.bias = jax.random.uniform(
            kb, (out_features,), jnp.float32, -bound, bound)

        self.in_features = in_features
        self.out_features = out_features
        self.use_bf16 = use_bf16                 # bf16 MXU operands, f32 accum
        self.tm_max = tm_max
        self.tn, self.Np = _select_n_tile(out_features, tn_max)
        self.tk, self.Kp = _select_k_tile(in_features, tk_max)

        op_dt = jnp.bfloat16 if use_bf16 else jnp.float32
        # Pad + transpose the constant parameters ONCE (not per forward call).
        self.w_packed, self.b_packed = _pack_params(
            self.weight, self.bias, self.Kp, self.Np, op_dt)

    def __call__(self, x, parameter_name_to_parameter=None):
        if parameter_name_to_parameter is not None:
            # Override path: pack the supplied params for this call.
            op_dt = jnp.bfloat16 if self.use_bf16 else jnp.float32
            w_packed, b_packed = _pack_params(
                parameter_name_to_parameter["weight"],
                parameter_name_to_parameter["bias"],
                self.Kp, self.Np, op_dt)
        else:
            w_packed, b_packed = self.w_packed, self.b_packed

        lead = x.shape[:-1]                      # F.linear supports (..., in)
        x2d = x.reshape(-1, x.shape[-1])
        y2d = pallas_linear(x2d, w_packed, b_packed,
                            n_out=self.out_features,
                            tn=self.tn, tk=self.tk,
                            tm_max=self.tm_max, use_bf16=self.use_bf16)
        return y2d.reshape(*lead, self.out_features)


if __name__ == "__main__":
    key = jax.random.PRNGKey(0)
    kx1, kp1, kx2, kp2 = jax.random.split(key, 4)

    # Case 1: small 3-D input, single grid step, N padded to one lane group.
    in_f, out_f = 256, 96
    x1 = jax.random.normal(kx1, (2, 8, in_f), jnp.float32)
    layer1 = LinearLayerPallas(kp1, in_f, out_f)
    y1 = jax.block_until_ready(jax.jit(layer1.__call__)(x1))
    ref1 = x1 @ layer1.weight.T + layer1.bias
    assert y1.shape == (2, 8, out_f) and y1.dtype == jnp.float32
    assert bool(jnp.all(jnp.isfinite(y1)))
    assert bool(jnp.allclose(y1, ref1, atol=1e-4, rtol=1e-4))

    # Case 2: exercises K-axis accumulation (grid_k=2) and 2 N blocks.
    in_f2, out_f2 = 512, 256
    x2 = jax.random.normal(kx2, (4, in_f2), jnp.float32)
    layer2 = LinearLayerPallas(kp2, in_f2, out_f2, tk_max=256)
    y2 = jax.block_until_ready(jax.jit(layer2.__call__)(x2))
    ref2 = x2 @ layer2.weight.T + layer2.bias
    assert y2.shape == (4, out_f2) and y2.dtype == jnp.float32
    assert bool(jnp.all(jnp.isfinite(y2)))
    assert bool(jnp.allclose(y2, ref2, atol=1e-4, rtol=1e-4))

    print("KERNEL_OK")
</pallas_src>

<mosaic_0001>
module attributes {stable_mosaic.version = 11 : i64} {
  func.func @_linear_kernel(%arg0: i32, %arg1: i32, %arg2: i32, %arg3: memref<16x256xf32, #tpu.memory_space<vmem>>, %arg4: memref<256x128xf32, #tpu.memory_space<vmem>>, %arg5: memref<1x128xf32, #tpu.memory_space<vmem>>, %arg6: memref<16x128xf32, #tpu.memory_space<vmem>>) attributes {dimension_semantics = [#tpu.dimension_semantics<parallel>, #tpu.dimension_semantics<parallel>, #tpu.dimension_semantics<arbitrary>], iteration_bounds = array<i64: 1, 1, 1>, scalar_prefetch = 0 : i64, scratch_operands = 0 : i64, tpu.core_type = #tpu.core_type<tc>, window_params = [{transform_indices = @transform_0, window_bounds = array<i64: 16, 256>}, {transform_indices = @transform_1, window_bounds = array<i64: 256, 128>}, {transform_indices = @transform_2, window_bounds = array<i64: 1, 128>}, {transform_indices = @transform_3, window_bounds = array<i64: 16, 128>}]} {
    %c0_i32 = arith.constant 0 : i32
    %0 = arith.cmpi eq, %arg2, %c0_i32 : i32
    %1 = arith.extui %0 : i1 to i32
    %c0_i32_0 = arith.constant 0 : i32
    %2 = arith.cmpi ne, %1, %c0_i32_0 : i32
    scf.if %2 {
      %c0_8 = arith.constant 0 : index
      %c0_9 = arith.constant 0 : index
      %9 = vector.load %arg5[%c0_8, %c0_9] : memref<1x128xf32, #tpu.memory_space<vmem>>, vector<1x128xf32>
      %10 = vector.shape_cast %9 : vector<1x128xf32> to vector<1x128xf32>
      %11 = vector.broadcast %10 : vector<1x128xf32> to vector<16x128xf32>
      %c0_10 = arith.constant 0 : index
      %c0_11 = arith.constant 0 : index
      %12 = vector.load %arg6[%c0_10, %c0_11] : memref<16x128xf32, #tpu.memory_space<vmem>>, vector<16x128xf32>
      tpu.vector_store %arg6[%c0_10, %c0_11], %11 {strides = array<i32>} : memref<16x128xf32, #tpu.memory_space<vmem>>, vector<16x128xf32>,
    } else {
    }
    %c0 = arith.constant 0 : index
    %c0_1 = arith.constant 0 : index
    %3 = vector.load %arg6[%c0, %c0_1] : memref<16x128xf32, #tpu.memory_space<vmem>>, vector<16x128xf32>
    %c0_2 = arith.constant 0 : index
    %c0_3 = arith.constant 0 : index
    %4 = vector.load %arg3[%c0_2, %c0_3] : memref<16x256xf32, #tpu.memory_space<vmem>>, vector<16x256xf32>
    %c0_4 = arith.constant 0 : index
    %c0_5 = arith.constant 0 : index
    %5 = vector.load %arg4[%c0_4, %c0_5] : memref<256x128xf32, #tpu.memory_space<vmem>>, vector<256x128xf32>
    %cst = arith.constant dense<0.000000e+00> : vector<16x128xf32>
    %6 = tpu.matmul %4, %5, %cst {dimension_numbers = #tpu.dot_dimension_numbers<[1], [0], [0], [1], [0, 0, 1, 1], [], []>} : vector<16x256xf32>, vector<256x128xf32>, vector<16x128xf32> -> vector<16x128xf32>
    %7 = arith.addf %3, %6 : vector<16x128xf32>
    %c0_6 = arith.constant 0 : index
    %c0_7 = arith.constant 0 : index
    %8 = vector.load %arg6[%c0_6, %c0_7] : memref<16x128xf32, #tpu.memory_space<vmem>>, vector<16x128xf32>
    tpu.vector_store %arg6[%c0_6, %c0_7], %7 {strides = array<i32>} : memref<16x128xf32, #tpu.memory_space<vmem>>, vector<16x128xf32>,
    return
  }
  func.func @transform_0(%arg0: i32, %arg1: i32, %arg2: i32) -> (i32, i32) {
    %c0_i32 = arith.constant 0 : i32
    return %arg0, %arg2 : i32, i32
  }
  func.func @transform_1(%arg0: i32, %arg1: i32, %arg2: i32) -> (i32, i32) {
    %c0_i32 = arith.constant 0 : i32
    return %arg2, %arg1 : i32, i32
  }
  func.func @transform_2(%arg0: i32, %arg1: i32, %arg2: i32) -> (i32, i32) {
    %c0_i32 = arith.constant 0 : i32
    %c0_i32_0 = arith.constant 0 : i32
    return %c0_i32, %arg1 : i32, i32
  }
  func.func @transform_3(%arg0: i32, %arg1: i32, %arg2: i32) -> (i32, i32) {
    %c0_i32 = arith.constant 0 : i32
    return %arg0, %arg1 : i32, i32
  }
}

</mosaic_0001>

<llo_original>
// kernel: a_call__.1
$region0: #{a_call__.1}
  #allocation0 [shape = 'u32[]', space=smem, size = 0x4, offset = 0x4, fixed_abs, tag = 'smem constant byte address 0x4 - core index']
  #allocation1 [shape = 'u32[144,128]{1,0:T(1,128)}', space=vmem, size = 0x12000, scoped, tag = 'internal scratch']
  %s0 = inlined_call_operand.hbm [shape: f32[16,256], index: 0, kind: input, shape index: {}]
  %s1 = inlined_call_operand.hbm [shape: f32[256,128], index: 1, kind: input, shape index: {}]
  %s2 = inlined_call_operand.vmem [shape: f32[1,128], index: 2, kind: input, shape index: {}]
  %s3 = inlined_call_operand.vmem [shape: f32[16,128], index: 3, kind: output, shape index: {}]
  %s4 = sld [smem:[#allocation0]]
  $region34: #{a_call__.1} parent=0
    _
  %s6 = ssub.s32 1, %s4
  %s7 = scalar_select 0, %s6, %s4
  $region1: #{a_call__.1} parent=0
    #allocation2 [shape = 'u8[16384]{0}', space=vmem, size = 0x4000, scoped, tag = 'input window, operand 0, single buffered']
    #allocation3 [shape = 's32[1]{0}', space=sflag, size = 0x4, scoped, tag = 'scoped memory for a_call__.1']
    #allocation4 [shape = 'u8[131072]{0}', space=vmem, size = 0x20000, scoped, tag = 'input window, operand 1, single buffered']
    #allocation5 [shape = 's32[1]{0}', space=sflag, size = 0x4, scoped, tag = 'scoped memory for a_call__.1']
    %8 = vsyncpa [#allocation3], 0
    %9 = vsyncpa [#allocation5], 0
    // Predicated region
    $region2: #{a_call__.1} parent=1 // pred_check
      _
    $region3: #{a_call__.1} parent=1 // pred_check_branch
      %11 = sbr.rel (0) target = $region5
    $region4: #{a_call__.1} parent=1 // pred_region
      %s13 = ssub.s32 512, 512
      %14 = vsyncadd [#allocation3], %s13
      %s15 = sshll.u32 [#allocation2], 4
      %s16 = int_to_ptr.vmem [resolvable:$true] %s15
      %21 = dma.hbm_to_vmem [thread:$0]  %s0, 512, %s16, [#allocation3], 256, 256, 16
    $region5: #{a_call__.1} parent=1 // pred_fallthru
      _
    // Predicated region
    $region6: #{a_call__.1} parent=1 // pred_check
      _
    $region7: #{a_call__.1} parent=1 // pred_check_branch
      %23 = sbr.rel (0) target = $region9
    $region8: #{a_call__.1} parent=1 // pred_region
      %s25 = ssub.s32 4096, 4096
      %26 = vsyncadd [#allocation5], %s25
      %s27 = sshll.u32 [#allocation4], 4
      %s28 = int_to_ptr.vmem [resolvable:$true] %s27
      %33 = dma.hbm_to_vmem [thread:$0]  %s1, 4096, %s28, [#allocation5], 128, 128, 8
    $region9: #{a_call__.1} parent=1 // pred_fallthru
      _
    // Predicated region
    $region10: #{a_call__.1} parent=1 // pred_check
      _
    $region11: #{a_call__.1} parent=1 // pred_check_branch
      %35 = sbr.rel (0) target = $region13
    $region12: #{a_call__.1} parent=1 // pred_region
      _
    $region13: #{a_call__.1} parent=1 // pred_fallthru
      _
    // Predicated region
    $region14: #{a_call__.1} parent=1 // pred_check
      _
    $region15: #{a_call__.1} parent=1 // pred_check_branch
      %37 = sbr.rel (0) target = $region17
    $region16: #{a_call__.1} parent=1 // pred_region
      %38 = dma.done [#allocation3], 512
    $region17: #{a_call__.1} parent=1 // pred_fallthru
      _
    // Predicated region
    $region18: #{a_call__.1} parent=1 // pred_check
      _
    $region19: #{a_call__.1} parent=1 // pred_check_branch
      %40 = sbr.rel (0) target = $region21
    $region20: #{a_call__.1} parent=1 // pred_region
      %41 = dma.done [#allocation5], 4096
    $region21: #{a_call__.1} parent=1 // pred_fallthru
      _
    %p42 = scmp.eq.s32.totalorder 0, 0
    // Predicated region
    $region22: #{a_call__.1} parent=1 // pred_check
      %p43 = pneg %p42
    $region23: #{a_call__.1} parent=1 // pred_check_branch
      %45 = sbr.rel (%p43) target = $region25
    $region24: #{a_call__.1} parent=1 // pred_region
      %v46 = vld [vmem:[%s2] sm:$0x1]
      %v48 = vlaneseq
      %v49 = vshrl.u32 %v48, 7
      %v50 = vsub.s32 0, %v49
      %v51 = vrot.slane %v46, %v50
      %53 = vst [vmem:[%s3] sm:$0xff] %v51
      %54 = vst [vmem:[%s3 + $0x8] sm:$0xff] %v51
    $region25: #{a_call__.1} parent=1 // pred_fallthru
      _
    %v55 = vld [vmem:[%s3] sm:$0xff]
    %v56 = vld [vmem:[%s3 + $0x8] sm:$0xff]
    %v57 = vld [vmem:[#allocation2] sm:$0xff]
    %v58 = vld [vmem:[#allocation2 + $0x8] sm:$0xff]
    %v59 = vld [vmem:[#allocation2 + $0x10] sm:$0xff]
    %v60 = vld [vmem:[#allocation2 + $0x18] sm:$0xff]
    %v61 = vld [vmem:[#allocation4] sm:$0xff]
    %v62 = vld [vmem:[#allocation4 + $0x8] sm:$0xff]
    %v63 = vld [vmem:[#allocation4 + $0x10] sm:$0xff]
    %v64 = vld [vmem:[#allocation4 + $0x18] sm:$0xff]
    %v65 = vld [vmem:[#allocation4 + $0x20] sm:$0xff]
    %v66 = vld [vmem:[#allocation4 + $0x28] sm:$0xff]
    %v67 = vld [vmem:[#allocation4 + $0x30] sm:$0xff]
    %v68 = vld [vmem:[#allocation4 + $0x38] sm:$0xff]
    %v69 = vld [vmem:[#allocation4 + $0x40] sm:$0xff]
    %v70 = vld [vmem:[#allocation4 + $0x48] sm:$0xff]
    %v71 = vld [vmem:[#allocation4 + $0x50] sm:$0xff]
    %v72 = vld [vmem:[#allocation4 + $0x58] sm:$0xff]
    %v73 = vld [vmem:[#allocation4 + $0x60] sm:$0xff]
    %v74 = vld [vmem:[#allocation4 + $0x68] sm:$0xff]
    %v75 = vld [vmem:[#allocation4 + $0x70] sm:$0xff]
    %v76 = vld [vmem:[#allocation4 + $0x78] sm:$0xff]
    %v77 = vld [vmem:[#allocation4 + $0x80] sm:$0xff]
    %v78 = vld [vmem:[#allocation4 + $0x88] sm:$0xff]
    %v79 = vld [vmem:[#allocation4 + $0x90] sm:$0xff]
    %v80 = vld [vmem:[#allocation4 + $0x98] sm:$0xff]
    %v81 = vld [vmem:[#allocation4 + $0xa0] sm:$0xff]
    %v82 = vld [vmem:[#allocation4 + $0xa8] sm:$0xff]
    %v83 = vld [vmem:[#allocation4 + $0xb0] sm:$0xff]
    %v84 = vld [vmem:[#allocation4 + $0xb8] sm:$0xff]
    %v85 = vld [vmem:[#allocation4 + $0xc0] sm:$0xff]
    %v86 = vld [vmem:[#allocation4 + $0xc8] sm:$0xff]
    %v87 = vld [vmem:[#allocation4 + $0xd0] sm:$0xff]
    %v88 = vld [vmem:[#allocation4 + $0xd8] sm:$0xff]
    %v89 = vld [vmem:[#allocation4 + $0xe0] sm:$0xff]
    %v90 = vld [vmem:[#allocation4 + $0xe8] sm:$0xff]
    %v91 = vld [vmem:[#allocation4 + $0xf0] sm:$0xff]
    %v92 = vld [vmem:[#allocation4 + $0xf8] sm:$0xff]
    %93 = vmatprep.subr.mxu0 0.0
    %94 = vmatpush1.msra.mxu0 %v61
    %95 = vmatprep.subr.mxu0 0.0
    %96 = vmatpush1.msra.mxu0 %v62
    %97 = vmatprep.subr.mxu0 0.0
    %98 = vmatpush1.msra.mxu0 %v63
    %99 = vmatprep.subr.mxu0 0.0
    %100 = vmatpush1.msra.mxu0 %v64
    %101 = vmatprep.subr.mxu0 0.0
    %102 = vmatpush1.msra.mxu0 %v65
    %103 = vmatprep.subr.mxu0 0.0
    %104 = vmatpush1.msra.mxu0 %v66
    %105 = vmatprep.subr.mxu0 0.0
    %106 = vmatpush1.msra.mxu0 %v67
    %107 = vmatprep.subr.mxu0 0.0
    %108 = vmatpush1.msra.mxu0 %v68
    %109 = vmatprep.subr.mxu0 0.0
    %110 = vmatpush1.msra.mxu0 %v69
    %111 = vmatprep.subr.mxu0 0.0
    %112 = vmatpush1.msra.mxu0 %v70
    %113 = vmatprep.subr.mxu0 0.0
    %114 = vmatpush1.msra.mxu0 %v71
    %115 = vmatprep.subr.mxu0 0.0
    %116 = vmatpush1.msra.mxu0 %v72
    %117 = vmatprep.subr.mxu0 0.0
    %118 = vmatpush1.msra.mxu0 %v73
    %119 = vmatprep.subr.mxu0 0.0
    %120 = vmatpush1.msra.mxu0 %v74
    %121 = vmatprep.subr.mxu0 0.0
    %122 = vmatpush1.msra.mxu0 %v75
    %123 = vmatprep.subr.mxu0 0.0
    %124 = vmatpush1.msra.mxu0 %v76
    %125 = vmatprep.subr.mxu0 0.0
    %126 = vmatpush1.msra.mxu0 %v77
    %127 = vmatprep.subr.mxu0 0.0
    %128 = vmatpush1.msra.mxu0 %v78
    %129 = vmatprep.subr.mxu0 0.0
    %130 = vmatpush1.msra.mxu0 %v79
    %131 = vmatprep.subr.mxu0 0.0
    %132 = vmatpush1.msra.mxu0 %v80
    %133 = vmatprep.subr.mxu0 0.0
    %134 = vmatpush1.msra.mxu0 %v81
    %135 = vmatprep.subr.mxu0 0.0
    %136 = vmatpush1.msra.mxu0 %v82
    %137 = vmatprep.subr.mxu0 0.0
    %138 = vmatpush1.msra.mxu0 %v83
    %139 = vmatprep.subr.mxu0 0.0
    %140 = vmatpush1.msra.mxu0 %v84
    %141 = vmatprep.subr.mxu0 0.0
    %142 = vmatpush1.msra.mxu0 %v85
    %143 = vmatprep.subr.mxu0 0.0
    %144 = vmatpush1.msra.mxu0 %v86
    %145 = vmatprep.subr.mxu0 0.0
    %146 = vmatpush1.msra.mxu0 %v87
    %147 = vmatprep.subr.mxu0 0.0
    %148 = vmatpush1.msra.mxu0 %v88
    %149 = vmatprep.subr.mxu0 0.0
    %150 = vmatpush1.msra.mxu0 %v89
    %151 = vmatprep.subr.mxu0 0.0
    %152 = vmatpush1.msra.mxu0 %v90
    %153 = vmatprep.subr.mxu0 0.0
    %154 = vmatpush1.msra.mxu0 %v91
    %155 = vmatprep.subr.mxu0 0.0
    %156 = vmatpush1.msra.mxu0 %v92
    %157 = vmatprep.mubr.f32.mxu0 %v58
    %158 = vmatmul.mubr.f32.gmra.mrb[0].mxu0 %v57
    %v159 = vpop.f32.mrb[0].mxu0
    %v160 = vadd.f32 0.0, %v159
    %v161 = vpop.f32.mrb[0].mxu0
    %162 = vmatprep.mubr.f32.mxu0 %v60
    %163 = vmatmul.mubr.f32.gmra.mrb[0].mxu0 %v59
    %v164 = vpop.f32.mrb[0].mxu0
    %v165 = vadd.f32 0.0, %v164
    %v166 = vpop.f32.mrb[0].mxu0
    %167 = vdwg.mxu0
    %v168 = vadd.f32 %v55, %v160
    %v169 = vadd.f32 %v56, %v165
    %170 = vst [vmem:[%s3] sm:$0xff] %v168
    %171 = vst [vmem:[%s3 + $0x8] sm:$0xff] %v169
    // Predicated region
    $region26: #{a_call__.1} parent=1 // pred_check
      _
    $region27: #{a_call__.1} parent=1 // pred_check_branch
      %173 = sbr.rel (0) target = $region29
    $region28: #{a_call__.1} parent=1 // pred_region
      _
    $region29: #{a_call__.1} parent=1 // pred_fallthru
      _
    // Predicated region
    $region30: #{a_call__.1} parent=1 // pred_check
      _
    $region31: #{a_call__.1} parent=1 // pred_check_branch
      %175 = sbr.rel (0) target = $region33
    $region32: #{a_call__.1} parent=1 // pred_region
      _
    $region33: #{a_call__.1} parent=1 // pred_fallthru
      _
    %176 = vsyncpa [#allocation3], 1
    %177 = vsyncpa [#allocation5], 1

</llo_original>
